<compile_context>
chip_gen: v7x
topology: tpu7x:2x2x1
jax: 0.10.0
libtpu: 0.0.40
codegen_flags: <defaults>
</compile_context>

<pallas_src>
import jax
import jax.numpy as jnp
from jax.experimental import pallas as pl
from jax.experimental.pallas import tpu as pltpu

# ----------------------------- problem sizes (small) -----------------------------
B = 1            # batch_size * num_images_per_prompt
C = 4            # num_channels_latents
H = W = 16       # latent spatial (reference uses 64x64; kept small)
T = H * W        # tokens per image (lane dimension, multiple of 128)
L = 8            # prompt sequence length
E = 32           # prompt embedding dim
D = 32           # synthetic unet hidden dim
NUM_STEPS = 50   # num_inference_steps
GUIDANCE_SCALE = 7.5
GUIDANCE_RESCALE = 0.0   # rescale_noise_cfg branch statically skipped (== reference)


# --------------------- fused 50-step denoising kernel ---------------------
def _denoise_kernel(scales_ref, dsigs_ref, ts_ref,          # scalar-prefetch (SMEM)
                    lat0_ref,                               # (C, T) initial latents
                    w_in_t_ref,                             # (D, C)  = W_in^T
                    w_t_ref,                                # (D, 1)  time-emb weights
                    ctx_ref,                                # (D, 2B) hoisted cond. bias
                    w_out_t_ref,                            # (C, D)  = W_out^T
                    o_ref):                                 # (C, T) VMEM-resident latents
    step = pl.program_id(0)

    # prepare_latents: seed the VMEM-resident accumulator on the first step only.
    @pl.when(step == 0)
    def _():
        o_ref[...] = lat0_ref[...]

    # scheduler scalars for this step (SMEM reads, scalar unit).
    scale = scales_ref[step]      # 1 / sqrt(sigma_i^2 + 1)   (scale_model_input)
    dsig = dsigs_ref[step]        # sigma_{i+1} - sigma_i     (Euler step)
    t = ts_ref[step]              # timestep

    # scheduler.scale_model_input -- both CFG branches see the same scaled latents,
    # so the concat([latents]*2) of the reference is never materialized.
    x = o_ref[...] * scale                                                # (C, T)

    # shared unet trunk: linear-in + time embedding, computed once.
    h = jnp.dot(w_in_t_ref[...], x, preferred_element_type=jnp.float32)   # (D, T)
    h = h + t * w_t_ref[...]                                              # (D, T)

    # per-branch conditioning bias (step-invariant, hoisted outside the loop).
    h_u = jnp.maximum(h + ctx_ref[:, 0:1], 0.0)   # uncond branch          (D, T)
    h_t = jnp.maximum(h + ctx_ref[:, 1:2], 0.0)   # text branch            (D, T)

    noise_uncond = jnp.dot(w_out_t_ref[...], h_u,
                           preferred_element_type=jnp.float32)            # (C, T)
    noise_text = jnp.dot(w_out_t_ref[...], h_t,
                         preferred_element_type=jnp.float32)              # (C, T)

    # classifier-free guidance + Euler step, fused in the epilogue.
    noise_pred = noise_uncond + GUIDANCE_SCALE * (noise_text - noise_uncond)
    # TODO(synk): rescale_noise_cfg is statically skipped (guidance_rescale == 0.0),
    # matching the reference control flow.
    o_ref[...] = o_ref[...] + dsig * noise_pred


def _denoise_loop(scales, dsigs, timesteps, lat0, w_in_t, w_t_t, ctx_t, w_out_t):
    """Single pallas_call running all NUM_STEPS denoising iterations."""
    const_idx = lambda s, scales_r, dsigs_r, ts_r: (0, 0)
    grid_spec = pltpu.PrefetchScalarGridSpec(
        num_scalar_prefetch=3,
        grid=(NUM_STEPS,),
        in_specs=[
            pl.BlockSpec((C, T), const_idx),        # initial latents (read at step 0)
            pl.BlockSpec((D, C), const_idx),        # W_in^T
            pl.BlockSpec((D, 1), const_idx),        # time-embedding weights
            pl.BlockSpec((D, 2 * B), const_idx),    # hoisted ctx bias (uncond | text)
            pl.BlockSpec((C, D), const_idx),        # W_out^T
        ],
        out_specs=pl.BlockSpec((C, T), const_idx),  # VMEM-resident accumulator
    )
    return pl.pallas_call(
        _denoise_kernel,
        out_shape=jax.ShapeDtypeStruct((C, T), jnp.float32),
        grid_spec=grid_spec,
        compiler_params=pltpu.CompilerParams(
            dimension_semantics=("arbitrary",)),    # true sequential dependency
    )(scales, dsigs, timesteps, lat0, w_in_t, w_t_t, ctx_t, w_out_t)


# ------------------------------ denoising driver ------------------------------
@jax.jit
def denoising_forward(prompt_embeds, params, key):
    """Mirror of Denoising.forward: prompt_embeds (2B, L, E) -> latents (B, C, H, W)."""
    w_in, w_t, w_ctx, w_out = params

    # --- synthetic Euler-discrete scheduler (deterministic, vectorized, one-time) ---
    sigmas = jnp.linspace(10.0, 0.1, NUM_STEPS, dtype=jnp.float32)
    sigmas = jnp.concatenate([sigmas, jnp.zeros((1,), jnp.float32)])
    timesteps = jnp.linspace(999.0, 0.0, NUM_STEPS, dtype=jnp.float32)
    scales = 1.0 / jnp.sqrt(sigmas[:-1] ** 2 + 1.0)     # scale_model_input factor
    dsigs = sigmas[1:] - sigmas[:-1]                    # Euler step size
    init_noise_sigma = sigmas[0]

    # prepare_latents: randn * init_noise_sigma (NCHW), then flatten to lane-dense
    # (C, H*W) -- a pure reshape since NCHW already has channels leading.
    latents_nchw = jax.random.normal(key, (B, C, H, W), jnp.float32) * init_noise_sigma
    lat0 = latents_nchw.reshape(C, T)

    # Hoisted step-invariant conditioning: (2B, L, E) -> (2B, D), transposed to (D, 2B)
    # so it broadcasts along lanes inside the kernel (column 0 = uncond, 1 = text).
    ctx_t = (jnp.mean(prompt_embeds, axis=1) @ w_ctx).T      # (D, 2B)

    # Transposed weights for the lane-dense (channels/hidden on sublanes) layout.
    w_in_t = w_in.T          # (D, C)
    w_t_t = w_t.T            # (D, 1)
    w_out_t = w_out.T        # (C, D)

    lat_final = _denoise_loop(scales, dsigs, timesteps, lat0,
                              w_in_t, w_t_t, ctx_t, w_out_t)
    return lat_final.reshape(B, C, H, W)


def init_params(key):
    k1, k2, k3, k4 = jax.random.split(key, 4)
    w_in = jax.random.normal(k1, (C, D), jnp.float32) * 0.2
    w_t = jax.random.normal(k2, (1, D), jnp.float32) * 0.01
    w_ctx = jax.random.normal(k3, (E, D), jnp.float32) * 0.1
    w_out = jax.random.normal(k4, (D, C), jnp.float32) * 0.2
    return w_in, w_t, w_ctx, w_out


if __name__ == "__main__":
    root = jax.random.PRNGKey(0)
    k_prompt, k_lat, k_params = jax.random.split(root, 3)

    # prompt_embeds for CFG: (2*B, L, E)  [uncond ; text]
    prompt_embeds = jax.random.normal(k_prompt, (2 * B, L, E), jnp.float32)
    params = init_params(k_params)

    latents = denoising_forward(prompt_embeds, params, k_lat)
    latents = jax.block_until_ready(latents)

    assert latents.shape == (B, C, H, W)
    assert bool(jnp.all(jnp.isfinite(latents)))
    print("KERNEL_OK")
</pallas_src>

<mosaic_0001>
module attributes {stable_mosaic.version = 11 : i64} {
  func.func @_denoise_kernel(%arg0: i32, %arg1: memref<50xf32, #tpu.memory_space<smem>>, %arg2: memref<50xf32, #tpu.memory_space<smem>>, %arg3: memref<50xf32, #tpu.memory_space<smem>>, %arg4: memref<4x256xf32, #tpu.memory_space<vmem>>, %arg5: memref<32x4xf32, #tpu.memory_space<vmem>>, %arg6: memref<32x1xf32, #tpu.memory_space<vmem>>, %arg7: memref<32x2xf32, #tpu.memory_space<vmem>>, %arg8: memref<4x32xf32, #tpu.memory_space<vmem>>, %arg9: memref<4x256xf32, #tpu.memory_space<vmem>>) attributes {dimension_semantics = [#tpu.dimension_semantics<arbitrary>], iteration_bounds = array<i64: 50>, scalar_prefetch = 3 : i64, scratch_operands = 0 : i64, tpu.core_type = #tpu.core_type<tc>, window_params = [{pipeline_mode = #tpu.pipeline_mode<synchronous>, transform_indices = @transform_0, window_bounds = array<i64: 4, 256>}, {pipeline_mode = #tpu.pipeline_mode<synchronous>, transform_indices = @transform_1, window_bounds = array<i64: 32, 4>}, {pipeline_mode = #tpu.pipeline_mode<synchronous>, transform_indices = @transform_2, window_bounds = array<i64: 32, 1>}, {pipeline_mode = #tpu.pipeline_mode<synchronous>, transform_indices = @transform_3, window_bounds = array<i64: 32, 2>}, {pipeline_mode = #tpu.pipeline_mode<synchronous>, transform_indices = @transform_4, window_bounds = array<i64: 4, 32>}, {pipeline_mode = #tpu.pipeline_mode<synchronous>, transform_indices = @transform_5, window_bounds = array<i64: 4, 256>}]} {
    %c0_i32 = arith.constant 0 : i32
    %0 = arith.cmpi eq, %arg0, %c0_i32 : i32
    %1 = arith.extui %0 : i1 to i32
    %c0_i32_0 = arith.constant 0 : i32
    %2 = arith.cmpi ne, %1, %c0_i32_0 : i32
    scf.if %2 {
      %c0_22 = arith.constant 0 : index
      %c0_23 = arith.constant 0 : index
      %42 = vector.load %arg4[%c0_22, %c0_23] : memref<4x256xf32, #tpu.memory_space<vmem>>, vector<4x256xf32>
      %c0_24 = arith.constant 0 : index
      %c0_25 = arith.constant 0 : index
      %43 = vector.load %arg9[%c0_24, %c0_25] : memref<4x256xf32, #tpu.memory_space<vmem>>, vector<4x256xf32>
      tpu.vector_store %arg9[%c0_24, %c0_25], %42 {strides = array<i32>} : memref<4x256xf32, #tpu.memory_space<vmem>>, vector<4x256xf32>,
    } else {
    }
    %3 = arith.index_cast %arg0 : i32 to index
    %4 = memref.load %arg1[%3] : memref<50xf32, #tpu.memory_space<smem>>
    %5 = arith.index_cast %arg0 : i32 to index
    %6 = memref.load %arg2[%5] : memref<50xf32, #tpu.memory_space<smem>>
    %7 = arith.index_cast %arg0 : i32 to index
    %8 = memref.load %arg3[%7] : memref<50xf32, #tpu.memory_space<smem>>
    %c0 = arith.constant 0 : index
    %c0_1 = arith.constant 0 : index
    %9 = vector.load %arg9[%c0, %c0_1] : memref<4x256xf32, #tpu.memory_space<vmem>>, vector<4x256xf32>
    %10 = vector.broadcast %4 : f32 to vector<4x256xf32>
    %11 = arith.mulf %9, %10 : vector<4x256xf32>
    %c0_2 = arith.constant 0 : index
    %c0_3 = arith.constant 0 : index
    %12 = vector.load %arg5[%c0_2, %c0_3] : memref<32x4xf32, #tpu.memory_space<vmem>>, vector<32x4xf32>
    %cst = arith.constant dense<0.000000e+00> : vector<32x256xf32>
    %13 = tpu.matmul %12, %11, %cst {dimension_numbers = #tpu.dot_dimension_numbers<[1], [0], [0], [1], [0, 0, 1, 1], [], []>} : vector<32x4xf32>, vector<4x256xf32>, vector<32x256xf32> -> vector<32x256xf32>
    %c0_4 = arith.constant 0 : index
    %c0_5 = arith.constant 0 : index
    %14 = vector.load %arg6[%c0_4, %c0_5] : memref<32x1xf32, #tpu.memory_space<vmem>>, vector<32x1xf32>
    %15 = vector.broadcast %8 : f32 to vector<32x1xf32>
    %16 = arith.mulf %15, %14 : vector<32x1xf32>
    %17 = vector.broadcast %16 : vector<32x1xf32> to vector<32x256xf32>
    %18 = arith.addf %13, %17 : vector<32x256xf32>
    %c0_6 = arith.constant 0 : index
    %c0_7 = arith.constant 0 : index
    %19 = vector.load %arg7[%c0_6, %c0_7] : memref<32x2xf32, #tpu.memory_space<vmem>>, vector<32x1xf32>
    %20 = vector.broadcast %19 : vector<32x1xf32> to vector<32x256xf32>
    %21 = arith.addf %18, %20 : vector<32x256xf32>
    %cst_8 = arith.constant 0.000000e+00 : f32
    %22 = vector.broadcast %cst_8 : f32 to vector<32x256xf32>
    %23 = arith.maximumf %21, %22 : vector<32x256xf32>
    %c0_9 = arith.constant 0 : index
    %c1 = arith.constant 1 : index
    %24 = vector.load %arg7[%c0_9, %c1] : memref<32x2xf32, #tpu.memory_space<vmem>>, vector<32x1xf32>
    %25 = vector.broadcast %24 : vector<32x1xf32> to vector<32x256xf32>
    %26 = arith.addf %18, %25 : vector<32x256xf32>
    %cst_10 = arith.constant 0.000000e+00 : f32
    %27 = vector.broadcast %cst_10 : f32 to vector<32x256xf32>
    %28 = arith.maximumf %26, %27 : vector<32x256xf32>
    %c0_11 = arith.constant 0 : index
    %c0_12 = arith.constant 0 : index
    %29 = vector.load %arg8[%c0_11, %c0_12] : memref<4x32xf32, #tpu.memory_space<vmem>>, vector<4x32xf32>
    %cst_13 = arith.constant dense<0.000000e+00> : vector<4x256xf32>
    %30 = tpu.matmul %29, %23, %cst_13 {dimension_numbers = #tpu.dot_dimension_numbers<[1], [0], [0], [1], [0, 0, 1, 1], [], []>} : vector<4x32xf32>, vector<32x256xf32>, vector<4x256xf32> -> vector<4x256xf32>
    %c0_14 = arith.constant 0 : index
    %c0_15 = arith.constant 0 : index
    %31 = vector.load %arg8[%c0_14, %c0_15] : memref<4x32xf32, #tpu.memory_space<vmem>>, vector<4x32xf32>
    %cst_16 = arith.constant dense<0.000000e+00> : vector<4x256xf32>
    %32 = tpu.matmul %31, %28, %cst_16 {dimension_numbers = #tpu.dot_dimension_numbers<[1], [0], [0], [1], [0, 0, 1, 1], [], []>} : vector<4x32xf32>, vector<32x256xf32>, vector<4x256xf32> -> vector<4x256xf32>
    %33 = arith.subf %32, %30 : vector<4x256xf32>
    %cst_17 = arith.constant 7.500000e+00 : f32
    %34 = vector.broadcast %cst_17 : f32 to vector<4x256xf32>
    %35 = arith.mulf %34, %33 : vector<4x256xf32>
    %36 = arith.addf %30, %35 : vector<4x256xf32>
    %c0_18 = arith.constant 0 : index
    %c0_19 = arith.constant 0 : index
    %37 = vector.load %arg9[%c0_18, %c0_19] : memref<4x256xf32, #tpu.memory_space<vmem>>, vector<4x256xf32>
    %38 = vector.broadcast %6 : f32 to vector<4x256xf32>
    %39 = arith.mulf %38, %36 : vector<4x256xf32>
    %40 = arith.addf %37, %39 : vector<4x256xf32>
    %c0_20 = arith.constant 0 : index
    %c0_21 = arith.constant 0 : index
    %41 = vector.load %arg9[%c0_20, %c0_21] : memref<4x256xf32, #tpu.memory_space<vmem>>, vector<4x256xf32>
    tpu.vector_store %arg9[%c0_20, %c0_21], %40 {strides = array<i32>} : memref<4x256xf32, #tpu.memory_space<vmem>>, vector<4x256xf32>,
    return
  }
  func.func @transform_0(%arg0: i32, %arg1: memref<50xf32, #tpu.memory_space<smem>>, %arg2: memref<50xf32, #tpu.memory_space<smem>>, %arg3: memref<50xf32, #tpu.memory_space<smem>>) -> (i32, i32) {
    %c0_i32 = arith.constant 0 : i32
    %c0_i32_0 = arith.constant 0 : i32
    %c0_i32_1 = arith.constant 0 : i32
    return %c0_i32, %c0_i32_0 : i32, i32
  }
  func.func @transform_1(%arg0: i32, %arg1: memref<50xf32, #tpu.memory_space<smem>>, %arg2: memref<50xf32, #tpu.memory_space<smem>>, %arg3: memref<50xf32, #tpu.memory_space<smem>>) -> (i32, i32) {
    %c0_i32 = arith.constant 0 : i32
    %c0_i32_0 = arith.constant 0 : i32
    %c0_i32_1 = arith.constant 0 : i32
    return %c0_i32, %c0_i32_0 : i32, i32
  }
  func.func @transform_2(%arg0: i32, %arg1: memref<50xf32, #tpu.memory_space<smem>>, %arg2: memref<50xf32, #tpu.memory_space<smem>>, %arg3: memref<50xf32, #tpu.memory_space<smem>>) -> (i32, i32) {
    %c0_i32 = arith.constant 0 : i32
    %c0_i32_0 = arith.constant 0 : i32
    %c0_i32_1 = arith.constant 0 : i32
    return %c0_i32, %c0_i32_0 : i32, i32
  }
  func.func @transform_3(%arg0: i32, %arg1: memref<50xf32, #tpu.memory_space<smem>>, %arg2: memref<50xf32, #tpu.memory_space<smem>>, %arg3: memref<50xf32, #tpu.memory_space<smem>>) -> (i32, i32) {
    %c0_i32 = arith.constant 0 : i32
    %c0_i32_0 = arith.constant 0 : i32
    %c0_i32_1 = arith.constant 0 : i32
    return %c0_i32, %c0_i32_0 : i32, i32
  }
  func.func @transform_4(%arg0: i32, %arg1: memref<50xf32, #tpu.memory_space<smem>>, %arg2: memref<50xf32, #tpu.memory_space<smem>>, %arg3: memref<50xf32, #tpu.memory_space<smem>>) -> (i32, i32) {
    %c0_i32 = arith.constant 0 : i32
    %c0_i32_0 = arith.constant 0 : i32
    %c0_i32_1 = arith.constant 0 : i32
    return %c0_i32, %c0_i32_0 : i32, i32
  }
  func.func @transform_5(%arg0: i32, %arg1: memref<50xf32, #tpu.memory_space<smem>>, %arg2: memref<50xf32, #tpu.memory_space<smem>>, %arg3: memref<50xf32, #tpu.memory_space<smem>>) -> (i32, i32) {
    %c0_i32 = arith.constant 0 : i32
    %c0_i32_0 = arith.constant 0 : i32
    %c0_i32_1 = arith.constant 0 : i32
    return %c0_i32, %c0_i32_0 : i32, i32
  }
}

</mosaic_0001>

<llo_original>
// kernel: denoising_forward.1
$region0: #{denoising_forward.1}
  #allocation0 [shape = 'u32[]', space=smem, size = 0x4, offset = 0x4, fixed_abs, tag = 'smem constant byte address 0x4 - core index']
  #allocation1 [shape = 'u32[144,128]{1,0:T(1,128)}', space=vmem, size = 0x12000, scoped, tag = 'internal scratch']
  #allocation2 [shape = 's32[1]{0}', space=sflag, size = 0x4, scoped, tag = 'scoped memory for denoising_forward.1']
  #allocation3 [shape = 'u8[512]{0}', space=smem, size = 0x200, scoped, tag = 'prefetched SMEM operand 0']
  #allocation4 [shape = 'u8[512]{0}', space=smem, size = 0x200, scoped, tag = 'prefetched SMEM operand 1']
  #allocation5 [shape = 'u8[512]{0}', space=smem, size = 0x200, scoped, tag = 'prefetched SMEM operand 2']
  %s0 = inlined_call_operand.vmem [shape: f32[50], index: 0, kind: input, shape index: {}]
  %s1 = inlined_call_operand.vmem [shape: f32[50], index: 1, kind: input, shape index: {}]
  %s2 = inlined_call_operand.vmem [shape: f32[50], index: 2, kind: input, shape index: {}]
  %s3 = inlined_call_operand.vmem [shape: f32[4,256], index: 3, kind: input, shape index: {}]
  %s4 = inlined_call_operand.vmem [shape: f32[32,4], index: 4, kind: input, shape index: {}]
  %s5 = inlined_call_operand.vmem [shape: f32[32,1], index: 5, kind: input, shape index: {}]
  %s6 = inlined_call_operand.vmem [shape: f32[32,2], index: 6, kind: input, shape index: {}]
  %s7 = inlined_call_operand.vmem [shape: f32[4,32], index: 7, kind: input, shape index: {}]
  %s8 = inlined_call_operand.vmem [shape: f32[4,256], index: 8, kind: output, shape index: {}]
  %s9 = sld [smem:[#allocation0]]
  $region57: #{denoising_forward.1} parent=0
    _
  %s11 = ssub.s32 1, %s9
  %s12 = scalar_select 0, %s11, %s9
  %s13 = sshll.u32 %s0, 4
  %s14 = int_to_ptr.vmem [resolvable:$true] %s13
  %16 = dma.vmem_to_smem %s14, 16, [#allocation3], [#allocation2]
  %s17 = sshll.u32 %s1, 4
  %s18 = int_to_ptr.vmem [resolvable:$true] %s17
  %20 = dma.vmem_to_smem %s18, 16, [#allocation4], [#allocation2]
  %s21 = sshll.u32 %s2, 4
  %s22 = int_to_ptr.vmem [resolvable:$true] %s21
  %24 = dma.vmem_to_smem %s22, 16, [#allocation5], [#allocation2]
  %25 = dma.done [#allocation2], 48
  %26 = sfence
  loop: start=0, step=1, limit=52
  $region2: #{denoising_forward.1} parent=0 // loop_pre_header
    _
  $region3: #{denoising_forward.1} parent=0 // loop_header
    %s28 = sphi 0, %s32
    %p29 = scmp.ge.s32.totalorder %s28, 52
    %s36 = sphi 0, %s36
    %s38 = sphi 0, %s36
    %s39 = sphi 0, %s38
    %s53 = sphi 0, %s39
    %s57 = sphi 0, %s57
    %s59 = sphi 0, %s57
    %s60 = sphi 0, %s59
    %s74 = sphi 0, %s60
    %s78 = sphi 0, %s78
    %s80 = sphi 0, %s78
    %s81 = sphi 0, %s80
    %s95 = sphi 0, %s81
    %s99 = sphi 0, %s99
    %s101 = sphi 0, %s99
    %s102 = sphi 0, %s101
    %s116 = sphi 0, %s102
    %s120 = sphi 0, %s120
    %s122 = sphi 0, %s120
    %s123 = sphi 0, %s122
    %s137 = sphi 0, %s123
    %s141 = sphi 0, %s141
    %s143 = sphi 0, %s141
    %s144 = sphi 0, %s143
    %s158 = sphi 0, %s144
  $region4: #{denoising_forward.1} parent=0 // loop_header_branch
    %31 = sbr.rel (%p29) target = $region8
  $region5: #{denoising_forward.1} parent=0 // loop_body
    %s33 = ssub.s32 %s28, 1
    %s34 = ssub.s32 %s28, 2
    %s35 = sadd.s32 %s28, 1
    %s37 = sadd.s32 %s36, 1
    %p40 = scmp.eq.s32.totalorder %s28, 49
    %p41 = scmp.ne.s32.totalorder %s36, %s38
    %p42 = scmp.eq.s32.totalorder %s28, 0
    %p43 = por %p41, %p42
    %p44 = scmp.ne.s32.totalorder %s36, %s38
    %p45 = scmp.eq.s32.totalorder %s33, 49
    %p46 = por %p44, %p45
    %p47 = scmp.ne.s32.totalorder %s38, %s39
    %p48 = scmp.eq.s32.totalorder %s33, 0
    %p49 = por %p47, %p48
    %p50 = scmp.ne.s32.totalorder %s38, %s39
    %p51 = scmp.eq.s32.totalorder %s34, 49
    %p52 = por %p50, %p51
    %p54 = scmp.ne.s32.totalorder %s39, %s53
    %p55 = scmp.eq.s32.totalorder %s34, 0
    %p56 = por %p54, %p55
    %s58 = sadd.s32 %s57, 1
    %p61 = scmp.eq.s32.totalorder %s28, 49
    %p62 = scmp.ne.s32.totalorder %s57, %s59
    %p63 = scmp.eq.s32.totalorder %s28, 0
    %p64 = por %p62, %p63
    %p65 = scmp.ne.s32.totalorder %s57, %s59
    %p66 = scmp.eq.s32.totalorder %s33, 49
    %p67 = por %p65, %p66
    %p68 = scmp.ne.s32.totalorder %s59, %s60
    %p69 = scmp.eq.s32.totalorder %s33, 0
    %p70 = por %p68, %p69
    %p71 = scmp.ne.s32.totalorder %s59, %s60
    %p72 = scmp.eq.s32.totalorder %s34, 49
    %p73 = por %p71, %p72
    %p75 = scmp.ne.s32.totalorder %s60, %s74
    %p76 = scmp.eq.s32.totalorder %s34, 0
    %p77 = por %p75, %p76
    %s79 = sadd.s32 %s78, 1
    %p82 = scmp.eq.s32.totalorder %s28, 49
    %p83 = scmp.ne.s32.totalorder %s78, %s80
    %p84 = scmp.eq.s32.totalorder %s28, 0
    %p85 = por %p83, %p84
    %p86 = scmp.ne.s32.totalorder %s78, %s80
    %p87 = scmp.eq.s32.totalorder %s33, 49
    %p88 = por %p86, %p87
    %p89 = scmp.ne.s32.totalorder %s80, %s81
    %p90 = scmp.eq.s32.totalorder %s33, 0
    %p91 = por %p89, %p90
    %p92 = scmp.ne.s32.totalorder %s80, %s81
    %p93 = scmp.eq.s32.totalorder %s34, 49
    %p94 = por %p92, %p93
    %p96 = scmp.ne.s32.totalorder %s81, %s95
    %p97 = scmp.eq.s32.totalorder %s34, 0
    %p98 = por %p96, %p97
    %s100 = sadd.s32 %s99, 1
    %p103 = scmp.eq.s32.totalorder %s28, 49
    %p104 = scmp.ne.s32.totalorder %s99, %s101
    %p105 = scmp.eq.s32.totalorder %s28, 0
    %p106 = por %p104, %p105
    %p107 = scmp.ne.s32.totalorder %s99, %s101
    %p108 = scmp.eq.s32.totalorder %s33, 49
    %p109 = por %p107, %p108
    %p110 = scmp.ne.s32.totalorder %s101, %s102
    %p111 = scmp.eq.s32.totalorder %s33, 0
    %p112 = por %p110, %p111
    %p113 = scmp.ne.s32.totalorder %s101, %s102
    %p114 = scmp.eq.s32.totalorder %s34, 49
    %p115 = por %p113, %p114
    %p117 = scmp.ne.s32.totalorder %s102, %s116
    %p118 = scmp.eq.s32.totalorder %s34, 0
    %p119 = por %p117, %p118
    %s121 = sadd.s32 %s120, 1
    %p124 = scmp.eq.s32.totalorder %s28, 49
    %p125 = scmp.ne.s32.totalorder %s120, %s122
    %p126 = scmp.eq.s32.totalorder %s28, 0
    %p127 = por %p125, %p126
    %p128 = scmp.ne.s32.totalorder %s120, %s122
    %p129 = scmp.eq.s32.totalorder %s33, 49
    %p130 = por %p128, %p129
    %p131 = scmp.ne.s32.totalorder %s122, %s123
    %p132 = scmp.eq.s32.totalorder %s33, 0
    %p133 = por %p131, %p132
    %p134 = scmp.ne.s32.totalorder %s122, %s123
    %p135 = scmp.eq.s32.totalorder %s34, 49
    %p136 = por %p134, %p135
    %p138 = scmp.ne.s32.totalorder %s123, %s137
    %p139 = scmp.eq.s32.totalorder %s34, 0
    %p140 = por %p138, %p139
    %s142 = sadd.s32 %s141, 1
    %p145 = scmp.eq.s32.totalorder %s28, 49
    %p146 = scmp.ne.s32.totalorder %s141, %s143
    %p147 = scmp.eq.s32.totalorder %s28, 0
    %p148 = por %p146, %p147
    %p149 = scmp.ne.s32.totalorder %s141, %s143
    %p150 = scmp.eq.s32.totalorder %s33, 49
    %p151 = por %p149, %p150
    %p152 = scmp.ne.s32.totalorder %s143, %s144
    %p153 = scmp.eq.s32.totalorder %s33, 0
    %p154 = por %p152, %p153
    %p155 = scmp.ne.s32.totalorder %s143, %s144
    %p156 = scmp.eq.s32.totalorder %s34, 49
    %p157 = por %p155, %p156
    %p159 = scmp.ne.s32.totalorder %s144, %s158
    %p160 = scmp.eq.s32.totalorder %s34, 0
    %p161 = por %p159, %p160
    %p162 = scmp.le.s32.totalorder 1, %s28
    %p163 = scmp.lt.s32.totalorder %s28, 51
    %p164 = pnand %p162, %p163
    %p165 = pneg %p164
    // Predicated region
    $region9: #{denoising_forward.1} parent=5 // pred_check
      _
    $region10: #{denoising_forward.1} parent=5 // pred_check_branch
      %167 = sbr.rel (%p164) target = $region12
    $region11: #{denoising_forward.1} parent=5 // pred_region
      %s168 = ssub.s32 %s28, 1
      // Predicated region
      $region13: #{denoising_forward.1} parent=11 // pred_check
        %p169 = pneg %p49
      $region14: #{denoising_forward.1} parent=11 // pred_check_branch
        %171 = sbr.rel (%p169) target = $region16
      $region15: #{denoising_forward.1} parent=11 // pred_region
        _
      $region16: #{denoising_forward.1} parent=11 // pred_fallthru
        _
      // Predicated region
      $region17: #{denoising_forward.1} parent=11 // pred_check
        %p172 = pneg %p70
      $region18: #{denoising_forward.1} parent=11 // pred_check_branch
        %174 = sbr.rel (%p172) target = $region20
      $region19: #{denoising_forward.1} parent=11 // pred_region
        _
      $region20: #{denoising_forward.1} parent=11 // pred_fallthru
        _
      // Predicated region
      $region21: #{denoising_forward.1} parent=11 // pred_check
        %p175 = pneg %p91
      $region22: #{denoising_forward.1} parent=11 // pred_check_branch
        %177 = sbr.rel (%p175) target = $region24
      $region23: #{denoising_forward.1} parent=11 // pred_region
        _
      $region24: #{denoising_forward.1} parent=11 // pred_fallthru
        _
      // Predicated region
      $region25: #{denoising_forward.1} parent=11 // pred_check
        %p178 = pneg %p112
      $region26: #{denoising_forward.1} parent=11 // pred_check_branch
        %180 = sbr.rel (%p178) target = $region28
      $region27: #{denoising_forward.1} parent=11 // pred_region
        _
      $region28: #{denoising_forward.1} parent=11 // pred_fallthru
        _
      // Predicated region
      $region29: #{denoising_forward.1} parent=11 // pred_check
        %p181 = pneg %p133
      $region30: #{denoising_forward.1} parent=11 // pred_check_branch
        %183 = sbr.rel (%p181) target = $region32
      $region31: #{denoising_forward.1} parent=11 // pred_region
        _
      $region32: #{denoising_forward.1} parent=11 // pred_fallthru
        _
    $region12: #{denoising_forward.1} parent=5 // pred_fallthru
      _
    %p184 = scmp.lt.s32.totalorder %s28, 50
    // Predicated region
    $region33: #{denoising_forward.1} parent=5 // pred_check
      %p185 = pneg %p184
    $region34: #{denoising_forward.1} parent=5 // pred_check_branch
      %187 = sbr.rel (%p185) target = $region36
    $region35: #{denoising_forward.1} parent=5 // pred_region
      _
    $region36: #{denoising_forward.1} parent=5 // pred_fallthru
      _
    %p188 = scmp.le.s32.totalorder 1, %s28
    %p189 = scmp.lt.s32.totalorder %s28, 51
    %p190 = pnand %p188, %p189
    %p191 = pneg %p190
    // Predicated region
    $region37: #{denoising_forward.1} parent=5 // pred_check
      _
    $region38: #{denoising_forward.1} parent=5 // pred_check_branch
      %193 = sbr.rel (%p190) target = $region40
    $region39: #{denoising_forward.1} parent=5 // pred_region
      %s194 = ssub.s32 %s28, 1
      %p195 = pneg %p49
      %p196 = pneg %p46
      %p197 = pneg %p70
      %p198 = pneg %p67
      %p199 = pneg %p91
      %p200 = pneg %p88
      %p201 = pneg %p112
      %p202 = pneg %p109
      %p203 = pneg %p133
      %p204 = pneg %p130
      %p205 = pneg %p154
      %p206 = pneg %p151
      %p207 = scmp.eq.s32.totalorder %s33, 0
      // Predicated region
      $region41: #{denoising_forward.1} parent=39 // pred_check
        %p208 = pneg %p207
      $region42: #{denoising_forward.1} parent=39 // pred_check_branch
        %210 = sbr.rel (%p208) target = $region44
      $region43: #{denoising_forward.1} parent=39 // pred_region
        %v211 = vld [vmem:[%s3] sm:$0xff]
        %212 = vst [vmem:[%s8] sm:$0xff] %v211
      $region44: #{denoising_forward.1} parent=39 // pred_fallthru
        _
      %s213 = sld [smem:[#allocation3 + %s33]]
      %s214 = sld [smem:[#allocation4 + %s33]]
      %s215 = sld [smem:[#allocation5 + %s33]]
      %v216 = vld [vmem:[%s8] sm:$0xff]
      %v217 = vstv %s213
      %v218 = vmul.f32 %v216, %v217
      %v219 = vld [vmem:[%s4] sm:$0xff]
      %v220 = vld [vmem:[%s4 + $0x8] sm:$0xff]
      %v221 = vld [vmem:[%s4 + $0x10] sm:$0xff]
      %v222 = vld [vmem:[%s4 + $0x18] sm:$0xff]
      %v223 = vld [vmem:[%s5] sm:$0xff]
      %v224 = vld [vmem:[%s5 + $0x8] sm:$0xff]
      %v225 = vld [vmem:[%s5 + $0x10] sm:$0xff]
      %v226 = vld [vmem:[%s5 + $0x18] sm:$0xff]
      %v227 = vstv %s215
      %v228 = vmul.f32 %v227, %v223
      %v229 = vmul.f32 %v227, %v224
      %v230 = vmul.f32 %v227, %v225
      %v231 = vmul.f32 %v227, %v226
      %233 = vset.pattern.permute.xlu0 0
      %234 = vperm.xlu0 %233, %v228
      %v235 = vpop.permute.xlu0 %234
      %238 = vset.pattern.permute.xlu0 0
      %239 = vperm.xlu0 %238, %v229
      %v240 = vpop.permute.xlu0 %239
      %243 = vset.pattern.permute.xlu0 0
      %244 = vperm.xlu0 %243, %v230
      %v245 = vpop.permute.xlu0 %244
      %248 = vset.pattern.permute.xlu0 0
      %249 = vperm.xlu0 %248, %v231
      %v250 = vpop.permute.xlu0 %249
      %v253 = vcombine.high %v218, %v218
      %vm254 = vcmask 31744
      %v256 = vsel %vm254, %v219, 0
      %v259 = vsel %vm254, %v220, 0
      %v262 = vsel %vm254, %v221, 0
      %v265 = vsel %vm254, %v222, 0
      %vm267 = vcmask 1043456
      %v268 = vsel %vm267, %v218, 0
      %v270 = vsel %vm267, %v253, 0
      %272 = vmatprep.subr.mxu0 %v270
      %273 = vmatpush1.msra.mxu0 %v268
      %274 = vmatprep.subr.mxu0 0.0
      %275 = vmatpush1.msra.mxu0 0.0
      %276 = vmatprep.subr.mxu0 0.0
      %277 = vmatpush1.msra.mxu0 0.0
      %278 = vmatprep.subr.mxu0 0.0
      %279 = vmatpush1.msra.mxu0 0.0
      %280 = vmatprep.subr.mxu0 0.0
      %281 = vmatpush1.msra.mxu0 0.0
      %282 = vmatprep.subr.mxu0 0.0
      %283 = vmatpush1.msra.mxu0 0.0
      %284 = vmatprep.subr.mxu0 0.0
      %285 = vmatpush1.msra.mxu0 0.0
      %286 = vmatprep.subr.mxu0 0.0
      %287 = vmatpush1.msra.mxu0 0.0
      %288 = vmatprep.subr.mxu0 0.0
      %289 = vmatpush1.msra.mxu0 0.0
      %290 = vmatprep.subr.mxu0 0.0
      %291 = vmatpush1.msra.mxu0 0.0
      %292 = vmatprep.subr.mxu0 0.0
      %293 = vmatpush1.msra.mxu0 0.0
      %294 = vmatprep.subr.mxu0 0.0
      %295 = vmatpush1.msra.mxu0 0.0
      %296 = vmatprep.subr.mxu0 0.0
      %297 = vmatpush1.msra.mxu0 0.0
      %298 = vmatprep.subr.mxu0 0.0
      %299 = vmatpush1.msra.mxu0 0.0
      %300 = vmatprep.subr.mxu0 0.0
      %301 = vmatpush1.msra.mxu0 0.0
      %302 = vmatprep.subr.mxu0 0.0
      %303 = vmatpush1.msra.mxu0 0.0
      %304 = vmatprep.subr.mxu0 0.0
      %305 = vmatpush1.msra.mxu0 0.0
      %306 = vmatprep.subr.mxu0 0.0
      %307 = vmatpush1.msra.mxu0 0.0
      %308 = vmatprep.subr.mxu0 0.0
      %309 = vmatpush1.msra.mxu0 0.0
      %310 = vmatprep.subr.mxu0 0.0
      %311 = vmatpush1.msra.mxu0 0.0
      %312 = vmatprep.subr.mxu0 0.0
      %313 = vmatpush1.msra.mxu0 0.0
      %314 = vmatprep.subr.mxu0 0.0
      %315 = vmatpush1.msra.mxu0 0.0
      %316 = vmatprep.subr.mxu0 0.0
      %317 = vmatpush1.msra.mxu0 0.0
      %318 = vmatprep.subr.mxu0 0.0
      %319 = vmatpush1.msra.mxu0 0.0
      %320 = vmatprep.subr.mxu0 0.0
      %321 = vmatpush1.msra.mxu0 0.0
      %322 = vmatprep.subr.mxu0 0.0
      %323 = vmatpush1.msra.mxu0 0.0
      %324 = vmatprep.subr.mxu0 0.0
      %325 = vmatpush1.msra.mxu0 0.0
      %326 = vmatprep.subr.mxu0 0.0
      %327 = vmatpush1.msra.mxu0 0.0
      %328 = vmatprep.subr.mxu0 0.0
      %329 = vmatpush1.msra.mxu0 0.0
      %330 = vmatprep.subr.mxu0 0.0
      %331 = vmatpush1.msra.mxu0 0.0
      %332 = vmatprep.subr.mxu0 0.0
      %333 = vmatpush1.msra.mxu0 0.0
      %334 = vmatprep.subr.mxu0 0.0
      %335 = vmatpush1.msra.mxu0 0.0
      %336 = vmatprep.mubr.f32.mxu0 0.0
      %337 = vmatmul.mubr.f32.gmra.mrb[0].mxu0 %v256
      %v338 = vpop.f32.mrb[0].mxu0
      %v339 = vadd.f32 %v235, %v338
      %v340 = vpop.f32.mrb[0].mxu0
      %v341 = vadd.f32 %v235, %v340
      %342 = vmatprep.mubr.f32.mxu0 0.0
      %343 = vmatmul.mubr.f32.gmra.mrb[0].mxu0 %v259
      %v344 = vpop.f32.mrb[0].mxu0
      %v345 = vadd.f32 %v240, %v344
      %v346 = vpop.f32.mrb[0].mxu0
      %v347 = vadd.f32 %v240, %v346
      %348 = vmatprep.mubr.f32.mxu0 0.0
      %349 = vmatmul.mubr.f32.gmra.mrb[0].mxu0 %v262
      %v350 = vpop.f32.mrb[0].mxu0
      %v351 = vadd.f32 %v245, %v350
      %v352 = vpop.f32.mrb[0].mxu0
      %v353 = vadd.f32 %v245, %v352
      %354 = vmatprep.mubr.f32.mxu0 0.0
      %355 = vmatmul.mubr.f32.gmra.mrb[0].mxu0 %v265
      %v356 = vpop.f32.mrb[0].mxu0
      %v357 = vadd.f32 %v250, %v356
      %v358 = vpop.f32.mrb[0].mxu0
      %v359 = vadd.f32 %v250, %v358
      %360 = vdwg.mxu0
      %v361 = vld [vmem:[%s6] sm:$0xff]
      %v362 = vld [vmem:[%s6 + $0x8] sm:$0xff]
      %v363 = vld [vmem:[%s6 + $0x10] sm:$0xff]
      %v364 = vld [vmem:[%s6 + $0x18] sm:$0xff]
      %366 = vset.pattern.permute.xlu0 0
      %367 = vperm.xlu0 %366, %v361
      %v368 = vpop.permute.xlu0 %367
      %371 = vset.pattern.permute.xlu0 0
      %372 = vperm.xlu0 %371, %v362
      %v373 = vpop.permute.xlu0 %372
      %376 = vset.pattern.permute.xlu0 0
      %377 = vperm.xlu0 %376, %v363
      %v378 = vpop.permute.xlu0 %377
      %381 = vset.pattern.permute.xlu0 0
      %382 = vperm.xlu0 %381, %v364
      %v383 = vpop.permute.xlu0 %382
      %v385 = vadd.f32 %v339, %v368
      %v386 = vadd.f32 %v341, %v368
      %v387 = vadd.f32 %v345, %v373
      %v388 = vadd.f32 %v347, %v373
      %v389 = vadd.f32 %v351, %v378
      %v390 = vadd.f32 %v353, %v378
      %v391 = vadd.f32 %v357, %v383
      %v392 = vadd.f32 %v359, %v383
      %v393 = vmax.f32 %v385, 0.0
      %v394 = vmax.f32 %v386, 0.0
      %v395 = vmax.f32 %v387, 0.0
      %v396 = vmax.f32 %v388, 0.0
      %v397 = vmax.f32 %v389, 0.0
      %v398 = vmax.f32 %v390, 0.0
      %v399 = vmax.f32 %v391, 0.0
      %v400 = vmax.f32 %v392, 0.0
      %401 = vset.pattern.permute.xlu0 1
      %402 = vperm.xlu0 %401, %v361
      %v403 = vpop.permute.xlu0 %402
      %405 = vset.pattern.permute.xlu0 1
      %406 = vperm.xlu0 %405, %v362
      %v407 = vpop.permute.xlu0 %406
      %409 = vset.pattern.permute.xlu0 1
      %410 = vperm.xlu0 %409, %v363
      %v411 = vpop.permute.xlu0 %410
      %413 = vset.pattern.permute.xlu0 1
      %414 = vperm.xlu0 %413, %v364
      %v415 = vpop.permute.xlu0 %414
      %v417 = vadd.f32 %v339, %v403
      %v418 = vadd.f32 %v341, %v403
      %v419 = vadd.f32 %v345, %v407
      %v420 = vadd.f32 %v347, %v407
      %v421 = vadd.f32 %v351, %v411
      %v422 = vadd.f32 %v353, %v411
      %v423 = vadd.f32 %v357, %v415
      %v424 = vadd.f32 %v359, %v415
      %v425 = vmax.f32 %v417, 0.0
      %v426 = vmax.f32 %v418, 0.0
      %v427 = vmax.f32 %v419, 0.0
      %v428 = vmax.f32 %v420, 0.0
      %v429 = vmax.f32 %v421, 0.0
      %v430 = vmax.f32 %v422, 0.0
      %v431 = vmax.f32 %v423, 0.0
      %v432 = vmax.f32 %v424, 0.0
      %v433 = vld [vmem:[%s7] sm:$0xf]
      %vm434 = vcmask 261120
      %v436 = vsel %vm434, %v433, 0
      %438 = vmatprep.subr.mxu0 %v394
      %439 = vmatpush1.msra.mxu0 %v393
      %440 = vmatprep.subr.mxu0 %v396
      %441 = vmatpush1.msra.mxu0 %v395
      %442 = vmatprep.subr.mxu0 %v398
      %443 = vmatpush1.msra.mxu0 %v397
      %444 = vmatprep.subr.mxu0 %v400
      %445 = vmatpush1.msra.mxu0 %v399
      %446 = vmatprep.subr.mxu0 0.0
      %447 = vmatpush1.msra.mxu0 0.0
      %448 = vmatprep.subr.mxu0 0.0
      %449 = vmatpush1.msra.mxu0 0.0
      %450 = vmatprep.subr.mxu0 0.0
      %451 = vmatpush1.msra.mxu0 0.0
      %452 = vmatprep.subr.mxu0 0.0
      %453 = vmatpush1.msra.mxu0 0.0
      %454 = vmatprep.subr.mxu0 0.0
      %455 = vmatpush1.msra.mxu0 0.0
      %456 = vmatprep.subr.mxu0 0.0
      %457 = vmatpush1.msra.mxu0 0.0
      %458 = vmatprep.subr.mxu0 0.0
      %459 = vmatpush1.msra.mxu0 0.0
      %460 = vmatprep.subr.mxu0 0.0
      %461 = vmatpush1.msra.mxu0 0.0
      %462 = vmatprep.subr.mxu0 0.0
      %463 = vmatpush1.msra.mxu0 0.0
      %464 = vmatprep.subr.mxu0 0.0
      %465 = vmatpush1.msra.mxu0 0.0
      %466 = vmatprep.subr.mxu0 0.0
      %467 = vmatpush1.msra.mxu0 0.0
      %468 = vmatprep.subr.mxu0 0.0
      %469 = vmatpush1.msra.mxu0 0.0
      %470 = vmatprep.subr.mxu0 0.0
      %471 = vmatpush1.msra.mxu0 0.0
      %472 = vmatprep.subr.mxu0 0.0
      %473 = vmatpush1.msra.mxu0 0.0
      %474 = vmatprep.subr.mxu0 0.0
      %475 = vmatpush1.msra.mxu0 0.0
      %476 = vmatprep.subr.mxu0 0.0
      %477 = vmatpush1.msra.mxu0 0.0
      %478 = vmatprep.subr.mxu0 0.0
      %479 = vmatpush1.msra.mxu0 0.0
      %480 = vmatprep.subr.mxu0 0.0
      %481 = vmatpush1.msra.mxu0 0.0
      %482 = vmatprep.subr.mxu0 0.0
      %483 = vmatpush1.msra.mxu0 0.0
      %484 = vmatprep.subr.mxu0 0.0
      %485 = vmatpush1.msra.mxu0 0.0
      %486 = vmatprep.subr.mxu0 0.0
      %487 = vmatpush1.msra.mxu0 0.0
      %488 = vmatprep.subr.mxu0 0.0
      %489 = vmatpush1.msra.mxu0 0.0
      %490 = vmatprep.subr.mxu0 0.0
      %491 = vmatpush1.msra.mxu0 0.0
      %492 = vmatprep.subr.mxu0 0.0
      %493 = vmatpush1.msra.mxu0 0.0
      %494 = vmatprep.subr.mxu0 0.0
      %495 = vmatpush1.msra.mxu0 0.0
      %496 = vmatprep.subr.mxu0 0.0
      %497 = vmatpush1.msra.mxu0 0.0
      %498 = vmatprep.subr.mxu0 0.0
      %499 = vmatpush1.msra.mxu0 0.0
      %500 = vmatprep.subr.mxu0 0.0
      %501 = vmatpush1.msra.mxu0 0.0
      %502 = vmatprep.mubr.f32.mxu0 0.0
      %503 = vmatmul.mubr.f32.gmra.mrb[0].mxu0 %v436
      %v504 = vpop.f32.mrb[0].mxu0
      %v505 = vadd.f32 0.0, %v504
      %v506 = vpop.f32.mrb[0].mxu0
      %v507 = vadd.f32 0.0, %v506
      %508 = vdwg.mxu0
      %509 = vmatprep.subr.mxu0 %v426
      %510 = vmatpush1.msra.mxu0 %v425
      %511 = vmatprep.subr.mxu0 %v428
      %512 = vmatpush1.msra.mxu0 %v427
      %513 = vmatprep.subr.mxu0 %v430
      %514 = vmatpush1.msra.mxu0 %v429
      %515 = vmatprep.subr.mxu0 %v432
      %516 = vmatpush1.msra.mxu0 %v431
      %517 = vmatprep.subr.mxu0 0.0
      %518 = vmatpush1.msra.mxu0 0.0
      %519 = vmatprep.subr.mxu0 0.0
      %520 = vmatpush1.msra.mxu0 0.0
      %521 = vmatprep.subr.mxu0 0.0
      %522 = vmatpush1.msra.mxu0 0.0
      %523 = vmatprep.subr.mxu0 0.0
      %524 = vmatpush1.msra.mxu0 0.0
      %525 = vmatprep.subr.mxu0 0.0
      %526 = vmatpush1.msra.mxu0 0.0
      %527 = vmatprep.subr.mxu0 0.0
      %528 = vmatpush1.msra.mxu0 0.0
      %529 = vmatprep.subr.mxu0 0.0
      %530 = vmatpush1.msra.mxu0 0.0
      %531 = vmatprep.subr.mxu0 0.0
      %532 = vmatpush1.msra.mxu0 0.0
      %533 = vmatprep.subr.mxu0 0.0
      %534 = vmatpush1.msra.mxu0 0.0
      %535 = vmatprep.subr.mxu0 0.0
      %536 = vmatpush1.msra.mxu0 0.0
      %537 = vmatprep.subr.mxu0 0.0
      %538 = vmatpush1.msra.mxu0 0.0
      %539 = vmatprep.subr.mxu0 0.0
      %540 = vmatpush1.msra.mxu0 0.0
      %541 = vmatprep.subr.mxu0 0.0
      %542 = vmatpush1.msra.mxu0 0.0
      %543 = vmatprep.subr.mxu0 0.0
      %544 = vmatpush1.msra.mxu0 0.0
      %545 = vmatprep.subr.mxu0 0.0
      %546 = vmatpush1.msra.mxu0 0.0
      %547 = vmatprep.subr.mxu0 0.0
      %548 = vmatpush1.msra.mxu0 0.0
      %549 = vmatprep.subr.mxu0 0.0
      %550 = vmatpush1.msra.mxu0 0.0
      %551 = vmatprep.subr.mxu0 0.0
      %552 = vmatpush1.msra.mxu0 0.0
      %553 = vmatprep.subr.mxu0 0.0
      %554 = vmatpush1.msra.mxu0 0.0
      %555 = vmatprep.subr.mxu0 0.0
      %556 = vmatpush1.msra.mxu0 0.0
      %557 = vmatprep.subr.mxu0 0.0
      %558 = vmatpush1.msra.mxu0 0.0
      %559 = vmatprep.subr.mxu0 0.0
      %560 = vmatpush1.msra.mxu0 0.0
      %561 = vmatprep.subr.mxu0 0.0
      %562 = vmatpush1.msra.mxu0 0.0
      %563 = vmatprep.subr.mxu0 0.0
      %564 = vmatpush1.msra.mxu0 0.0
      %565 = vmatprep.subr.mxu0 0.0
      %566 = vmatpush1.msra.mxu0 0.0
      %567 = vmatprep.subr.mxu0 0.0
      %568 = vmatpush1.msra.mxu0 0.0
      %569 = vmatprep.subr.mxu0 0.0
      %570 = vmatpush1.msra.mxu0 0.0
      %571 = vmatprep.subr.mxu0 0.0
      %572 = vmatpush1.msra.mxu0 0.0
      %573 = vmatprep.mubr.f32.mxu0 0.0
      %574 = vmatmul.mubr.f32.gmra.mrb[0].mxu0 %v436
      %v575 = vpop.f32.mrb[0].mxu0
      %v576 = vadd.f32 0.0, %v575
      %v577 = vpop.f32.mrb[0].mxu0
      %v578 = vadd.f32 0.0, %v577
      %579 = vdwg.mxu0
      %v580 = vsub.f32 %v576, %v505
      %v581 = vsub.f32 %v578, %v507
      %v582 = vmul.f32 %v580, 7.5
      %v583 = vmul.f32 %v581, 7.5
      %v584 = vadd.f32 %v505, %v582
      %v585 = vadd.f32 %v507, %v583
      %v586 = vstv %s214
      %v587 = vmul.f32 %v586, %v584
      %v588 = vmul.f32 %v586, %v585
      %v591 = vcombine.low %v587, %v588
      %v593 = vadd.f32 %v216, %v591
      %594 = vst [vmem:[%s8] sm:$0xff] %v593
      // Predicated region
      $region45: #{denoising_forward.1} parent=39 // pred_check
        %p595 = pneg %p151
      $region46: #{denoising_forward.1} parent=39 // pred_check_branch
        %597 = sbr.rel (%p595) target = $region48
      $region47: #{denoising_forward.1} parent=39 // pred_region
        _
      $region48: #{denoising_forward.1} parent=39 // pred_fallthru
        _
      // Predicated region
      $region49: #{denoising_forward.1} parent=39 // pred_check
        %p598 = pneg %p151
      $region50: #{denoising_forward.1} parent=39 // pred_check_branch
        %600 = sbr.rel (%p598) target = $region52
      $region51: #{denoising_forward.1} parent=39 // pred_region
        _
      $region52: #{denoising_forward.1} parent=39 // pred_fallthru
        _
    $region40: #{denoising_forward.1} parent=5 // pred_fallthru
      _
    %p601 = scmp.le.s32.totalorder 2, %s28
    // Predicated region
    $region53: #{denoising_forward.1} parent=5 // pred_check
      %p602 = pneg %p601
    $region54: #{denoising_forward.1} parent=5 // pred_check_branch
      %604 = sbr.rel (%p602) target = $region56
    $region55: #{denoising_forward.1} parent=5 // pred_region
      %s605 = ssub.s32 %s28, 2
    $region56: #{denoising_forward.1} parent=5 // pred_fallthru
      _
  $region6: #{denoising_forward.1} parent=0 // loop_footer
    %s32 = sadd.s32 1, %s28
  $region7: #{denoising_forward.1} parent=0 // loop_footer_branch
    %27 = sbr.rel target = $region3
  $region8: #{denoising_forward.1} parent=0 // loop_exit
    _

</llo_original>
